<compile_context>
chip_gen: v6e
topology: v6e:2x2x1
jax: 0.10.0
libtpu: 0.0.40
codegen_flags: <defaults>
</compile_context>

<pallas_src>
import functools

import jax
import jax.numpy as jnp
from jax.experimental import pallas as pl
from jax.experimental.pallas import tpu as pltpu

SUBLANE = 8
MIN_GRID_STEPS = 8          # >= 2 TensorCores x >= 3-4 pipeline steps on v7x
VMEM_LIMIT_BYTES = 48 << 20  # safe on v5e / v6e / v7x


def _round_up(x, m):
    return ((x + m - 1) // m) * m


def _pick_batch_tile(B, D, hidden, x_itemsize, out_itemsize, w_itemsize,
                     requested, vmem_limit_bytes):
    """Largest batch tile (multiple of 8) such that the double-buffered x/out tiles
    plus the VMEM-resident weights fit a conservative budget, while still leaving
    enough grid steps for megacore sharding + DMA/compute overlap."""
    # Weights / biases: charge 2 buffers each (Pallas default), even though we also
    # request single-buffering below - keeps the plan valid on any JAX version.
    weight_bytes = 2 * ((D * hidden + hidden * hidden + hidden * D) * w_itemsize
                        + (2 * hidden + D) * 4)
    budget = max((vmem_limit_bytes // 2) - weight_bytes, 1 << 20)

    # Per batch row: double-buffered x tile + double-buffered out tile + f32 working set.
    bytes_per_row = 2 * D * x_itemsize + 2 * D * out_itemsize + 4 * (2 * hidden + D)
    cap = max(SUBLANE, (budget // max(bytes_per_row, 1)) // SUBLANE * SUBLANE)

    # Ensure >= MIN_GRID_STEPS grid steps whenever the batch is large enough.
    if B >= MIN_GRID_STEPS * SUBLANE:
        steps_cap = max(SUBLANE, (B // MIN_GRID_STEPS) // SUBLANE * SUBLANE)
    else:
        steps_cap = max(SUBLANE, _round_up(B, SUBLANE))

    return max(SUBLANE, min(requested, cap, steps_cap))


def _autoencoder_kernel(x_ref,
                        w1_ref, b1_ref,     # encoder layer 1 : D   -> 128
                        w23_ref, b23_ref,   # fused bottleneck: 128 -> 128
                        w4_ref, b4_ref,     # decoder layer 2 : 128 -> D
                        out_ref, *, compute_dtype):
    # Cast to the MXU compute dtype in-kernel (x streamed in its original dtype).
    x = x_ref[...].astype(compute_dtype)                             # [TB, D]

    h1 = jnp.dot(x, w1_ref[...], preferred_element_type=jnp.float32) + b1_ref[...]
    h1 = jnp.maximum(h1, 0.0).astype(compute_dtype)                  # encoder ReLU

    h2 = jnp.dot(h1, w23_ref[...], preferred_element_type=jnp.float32) + b23_ref[...]
    h2 = jnp.maximum(h2, 0.0).astype(compute_dtype)                  # decoder ReLU

    recon = jnp.dot(h2, w4_ref[...], preferred_element_type=jnp.float32) + b4_ref[...]
    out_ref[...] = recon.astype(out_ref.dtype)                       # single HBM write stream


def autoencoder_forward(x, params, *, batch_tile=1024,
                        compute_dtype=jnp.bfloat16, out_dtype=None):
    """x: [B, D]. params: dict of pre-transposed (in, out) weights and (1, out) biases."""
    B, D = x.shape
    hidden = params["w1"].shape[1]                      # 128
    out_dtype = x.dtype if out_dtype is None else out_dtype

    # --- constant-fold the rank-L bottleneck (encoder L2 -> decoder L1, no ReLU between)
    w23 = jnp.dot(params["w2"], params["w3"], preferred_element_type=jnp.float32)
    b23 = jnp.dot(params["b2"], params["w3"], preferred_element_type=jnp.float32) + params["b3"]

    # Weights / biases are tiny -> one-time casts here are cheap.  x is NOT touched.
    w1 = params["w1"].astype(compute_dtype)
    w23 = w23.astype(compute_dtype)
    w4 = params["w4"].astype(compute_dtype)
    b1 = params["b1"].astype(jnp.float32)
    b23 = b23.astype(jnp.float32)
    b4 = params["b4"].astype(jnp.float32)

    x_isz = jnp.dtype(x.dtype).itemsize
    o_isz = jnp.dtype(out_dtype).itemsize
    w_isz = jnp.dtype(compute_dtype).itemsize

    tb = _pick_batch_tile(B, D, hidden, x_isz, o_isz, w_isz,
                          batch_tile, VMEM_LIMIT_BYTES)
    grid = (pl.cdiv(B, tb),)                            # ragged last tile masked by Pallas

    flops = 2 * B * (D * hidden + hidden * hidden + hidden * D)
    bytes_accessed = (x.size * x_isz                    # x read once, original dtype
                      + B * D * o_isz                   # output written once
                      + (w1.size + w23.size + w4.size) * w_isz
                      + (b1.size + b23.size + b4.size) * 4)

    kernel = functools.partial(_autoencoder_kernel, compute_dtype=compute_dtype)
    tile_spec = pl.BlockSpec((tb, D), lambda i: (i, 0))  # full-extent last dim: no padding

    def run(single_buffer_weights):
        def resident(arr):  # full array, same block every step -> stays VMEM-resident
            if single_buffer_weights:
                return pl.BlockSpec(arr.shape, lambda i: (0, 0),
                                    pipeline_mode=pl.Buffered(1))
            return pl.BlockSpec(arr.shape, lambda i: (0, 0))

        return pl.pallas_call(
            kernel,
            out_shape=jax.ShapeDtypeStruct((B, D), out_dtype),
            grid=grid,
            in_specs=[tile_spec,
                      resident(w1), resident(b1),
                      resident(w23), resident(b23),
                      resident(w4), resident(b4)],
            out_specs=tile_spec,
            compiler_params=pltpu.CompilerParams(
                dimension_semantics=("parallel",),
                vmem_limit_bytes=VMEM_LIMIT_BYTES),
            cost_estimate=pl.CostEstimate(flops=flops, transcendentals=0,
                                          bytes_accessed=bytes_accessed),
        )(x, w1, b1, w23, b23, w4, b4)

    try:
        # Single-buffer the constant-index weight/bias blocks (v7x VMEM headroom).
        return run(single_buffer_weights=True)
    except Exception:
        # pipeline_mode=pl.Buffered may be unavailable on this JAX version; default
        # double-buffered weights are already accounted for in the VMEM budget.
        return run(single_buffer_weights=False)


def init_params(key, input_dim, latent_dim=2, hidden=128):
    """Deterministic init. Weights stored as (in, out) = W.T of the PyTorch layout."""
    ks = jax.random.split(key, 8)

    def lin(kw, kb, fan_in, fan_out):
        bound = 1.0 / jnp.sqrt(jnp.float32(fan_in))      # PyTorch nn.Linear default
        w = jax.random.uniform(kw, (fan_in, fan_out), jnp.float32, -bound, bound)
        b = jax.random.uniform(kb, (1, fan_out), jnp.float32, -bound, bound)
        return w, b

    w1, b1 = lin(ks[0], ks[1], input_dim, hidden)
    w2, b2 = lin(ks[2], ks[3], hidden, latent_dim)
    w3, b3 = lin(ks[4], ks[5], latent_dim, hidden)
    w4, b4 = lin(ks[6], ks[7], hidden, input_dim)
    return {"w1": w1, "b1": b1, "w2": w2, "b2": b2,
            "w3": w3, "b3": b3, "w4": w4, "b4": b4}


def reference_forward(x, p):
    """Unfused f32 reference with the exact PyTorch-module semantics."""
    h1 = jnp.maximum(x @ p["w1"] + p["b1"], 0.0)
    z = h1 @ p["w2"] + p["b2"]
    h2 = jnp.maximum(z @ p["w3"] + p["b3"], 0.0)
    return h2 @ p["w4"] + p["b4"]


if __name__ == "__main__":
    key = jax.random.PRNGKey(0)
    k_x, k_p = jax.random.split(key)

    B, D, L = 8, 16, 2
    x = jax.random.normal(k_x, (B, D), dtype=jnp.float32)
    params = init_params(k_p, input_dim=D, latent_dim=L)

    ref = reference_forward(x, params)

    # Tight check on the f32-operand path (only difference vs. reference is the
    # fused bottleneck, at f32 rounding level).
    out_f32 = jax.block_until_ready(
        autoencoder_forward(x, params, compute_dtype=jnp.float32))
    assert out_f32.shape == (B, D)
    assert out_f32.dtype == x.dtype
    assert jnp.allclose(out_f32, ref, atol=1e-3, rtol=1e-3)

    # Performance path: bf16 MXU operands, f32 accumulation, original-dtype output.
    out = jax.block_until_ready(autoencoder_forward(x, params))
    assert out.shape == (B, D)
    assert out.dtype == x.dtype
    rel_err = jnp.linalg.norm(out - ref) / jnp.linalg.norm(ref)
    assert float(rel_err) < 0.05

    print("KERNEL_OK")
</pallas_src>

<mosaic_0001>
module attributes {stable_mosaic.version = 11 : i64} {
  func.func @_autoencoder_kernel(%arg0: i32, %arg1: memref<8x16xf32, #tpu.memory_space<vmem>>, %arg2: memref<16x128xf32, #tpu.memory_space<vmem>>, %arg3: memref<1x128xf32, #tpu.memory_space<vmem>>, %arg4: memref<128x128xf32, #tpu.memory_space<vmem>>, %arg5: memref<1x128xf32, #tpu.memory_space<vmem>>, %arg6: memref<128x16xf32, #tpu.memory_space<vmem>>, %arg7: memref<1x16xf32, #tpu.memory_space<vmem>>, %arg8: memref<8x16xf32, #tpu.memory_space<vmem>>) attributes {dimension_semantics = [#tpu.dimension_semantics<parallel>], iteration_bounds = array<i64: 1>, scalar_prefetch = 0 : i64, scratch_operands = 0 : i64, tpu.core_type = #tpu.core_type<tc>, window_params = [{transform_indices = @transform_0, window_bounds = array<i64: 8, 16>}, {pipeline_mode = #tpu.pipeline_mode<synchronous>, transform_indices = @transform_1, window_bounds = array<i64: 16, 128>}, {pipeline_mode = #tpu.pipeline_mode<synchronous>, transform_indices = @transform_2, window_bounds = array<i64: 1, 128>}, {pipeline_mode = #tpu.pipeline_mode<synchronous>, transform_indices = @transform_3, window_bounds = array<i64: 128, 128>}, {pipeline_mode = #tpu.pipeline_mode<synchronous>, transform_indices = @transform_4, window_bounds = array<i64: 1, 128>}, {pipeline_mode = #tpu.pipeline_mode<synchronous>, transform_indices = @transform_5, window_bounds = array<i64: 128, 16>}, {pipeline_mode = #tpu.pipeline_mode<synchronous>, transform_indices = @transform_6, window_bounds = array<i64: 1, 16>}, {transform_indices = @transform_7, window_bounds = array<i64: 8, 16>}]} {
    %c0 = arith.constant 0 : index
    %c0_0 = arith.constant 0 : index
    %0 = vector.load %arg1[%c0, %c0_0] : memref<8x16xf32, #tpu.memory_space<vmem>>, vector<8x16xf32>
    %c0_1 = arith.constant 0 : index
    %c0_2 = arith.constant 0 : index
    %1 = vector.load %arg2[%c0_1, %c0_2] : memref<16x128xf32, #tpu.memory_space<vmem>>, vector<16x128xf32>
    %cst = arith.constant dense<0.000000e+00> : vector<8x128xf32>
    %2 = tpu.matmul %0, %1, %cst {dimension_numbers = #tpu.dot_dimension_numbers<[1], [0], [0], [1], [0, 0, 1, 1], [], []>} : vector<8x16xf32>, vector<16x128xf32>, vector<8x128xf32> -> vector<8x128xf32>
    %c0_3 = arith.constant 0 : index
    %c0_4 = arith.constant 0 : index
    %3 = vector.load %arg3[%c0_3, %c0_4] : memref<1x128xf32, #tpu.memory_space<vmem>>, vector<1x128xf32>
    %4 = vector.broadcast %3 : vector<1x128xf32> to vector<8x128xf32>
    %5 = arith.addf %2, %4 : vector<8x128xf32>
    %cst_5 = arith.constant 0.000000e+00 : f32
    %6 = vector.broadcast %cst_5 : f32 to vector<8x128xf32>
    %7 = arith.maximumf %5, %6 : vector<8x128xf32>
    %c0_6 = arith.constant 0 : index
    %c0_7 = arith.constant 0 : index
    %8 = vector.load %arg4[%c0_6, %c0_7] : memref<128x128xf32, #tpu.memory_space<vmem>>, vector<128x128xf32>
    %cst_8 = arith.constant dense<0.000000e+00> : vector<8x128xf32>
    %9 = tpu.matmul %7, %8, %cst_8 {dimension_numbers = #tpu.dot_dimension_numbers<[1], [0], [0], [1], [0, 0, 1, 1], [], []>} : vector<8x128xf32>, vector<128x128xf32>, vector<8x128xf32> -> vector<8x128xf32>
    %c0_9 = arith.constant 0 : index
    %c0_10 = arith.constant 0 : index
    %10 = vector.load %arg5[%c0_9, %c0_10] : memref<1x128xf32, #tpu.memory_space<vmem>>, vector<1x128xf32>
    %11 = vector.broadcast %10 : vector<1x128xf32> to vector<8x128xf32>
    %12 = arith.addf %9, %11 : vector<8x128xf32>
    %cst_11 = arith.constant 0.000000e+00 : f32
    %13 = vector.broadcast %cst_11 : f32 to vector<8x128xf32>
    %14 = arith.maximumf %12, %13 : vector<8x128xf32>
    %c0_12 = arith.constant 0 : index
    %c0_13 = arith.constant 0 : index
    %15 = vector.load %arg6[%c0_12, %c0_13] : memref<128x16xf32, #tpu.memory_space<vmem>>, vector<128x16xf32>
    %cst_14 = arith.constant dense<0.000000e+00> : vector<8x16xf32>
    %16 = tpu.matmul %14, %15, %cst_14 {dimension_numbers = #tpu.dot_dimension_numbers<[1], [0], [0], [1], [0, 0, 1, 1], [], []>} : vector<8x128xf32>, vector<128x16xf32>, vector<8x16xf32> -> vector<8x16xf32>
    %c0_15 = arith.constant 0 : index
    %c0_16 = arith.constant 0 : index
    %17 = vector.load %arg7[%c0_15, %c0_16] : memref<1x16xf32, #tpu.memory_space<vmem>>, vector<1x16xf32>
    %18 = vector.broadcast %17 : vector<1x16xf32> to vector<8x16xf32>
    %19 = arith.addf %16, %18 : vector<8x16xf32>
    %c0_17 = arith.constant 0 : index
    %c0_18 = arith.constant 0 : index
    %20 = vector.load %arg8[%c0_17, %c0_18] : memref<8x16xf32, #tpu.memory_space<vmem>>, vector<8x16xf32>
    tpu.vector_store %arg8[%c0_17, %c0_18], %19 {strides = array<i32>} : memref<8x16xf32, #tpu.memory_space<vmem>>, vector<8x16xf32>,
    return
  }
  func.func @transform_0(%arg0: i32) -> (i32, i32) {
    %c0_i32 = arith.constant 0 : i32
    %c0_i32_0 = arith.constant 0 : i32
    return %arg0, %c0_i32 : i32, i32
  }
  func.func @transform_1(%arg0: i32) -> (i32, i32) {
    %c0_i32 = arith.constant 0 : i32
    %c0_i32_0 = arith.constant 0 : i32
    %c0_i32_1 = arith.constant 0 : i32
    return %c0_i32, %c0_i32_0 : i32, i32
  }
  func.func @transform_2(%arg0: i32) -> (i32, i32) {
    %c0_i32 = arith.constant 0 : i32
    %c0_i32_0 = arith.constant 0 : i32
    %c0_i32_1 = arith.constant 0 : i32
    return %c0_i32, %c0_i32_0 : i32, i32
  }
  func.func @transform_3(%arg0: i32) -> (i32, i32) {
    %c0_i32 = arith.constant 0 : i32
    %c0_i32_0 = arith.constant 0 : i32
    %c0_i32_1 = arith.constant 0 : i32
    return %c0_i32, %c0_i32_0 : i32, i32
  }
  func.func @transform_4(%arg0: i32) -> (i32, i32) {
    %c0_i32 = arith.constant 0 : i32
    %c0_i32_0 = arith.constant 0 : i32
    %c0_i32_1 = arith.constant 0 : i32
    return %c0_i32, %c0_i32_0 : i32, i32
  }
  func.func @transform_5(%arg0: i32) -> (i32, i32) {
    %c0_i32 = arith.constant 0 : i32
    %c0_i32_0 = arith.constant 0 : i32
    %c0_i32_1 = arith.constant 0 : i32
    return %c0_i32, %c0_i32_0 : i32, i32
  }
  func.func @transform_6(%arg0: i32) -> (i32, i32) {
    %c0_i32 = arith.constant 0 : i32
    %c0_i32_0 = arith.constant 0 : i32
    %c0_i32_1 = arith.constant 0 : i32
    return %c0_i32, %c0_i32_0 : i32, i32
  }
  func.func @transform_7(%arg0: i32) -> (i32, i32) {
    %c0_i32 = arith.constant 0 : i32
    %c0_i32_0 = arith.constant 0 : i32
    return %arg0, %c0_i32 : i32, i32
  }
}

module attributes {stable_mosaic.version = 11 : i64} {
  func.func @_autoencoder_kernel(%arg0: i32, %arg1: memref<8x16xf32, #tpu.memory_space<vmem>>, %arg2: memref<16x128xf32, #tpu.memory_space<vmem>>, %arg3: memref<1x128xf32, #tpu.memory_space<vmem>>, %arg4: memref<128x128xf32, #tpu.memory_space<vmem>>, %arg5: memref<1x128xf32, #tpu.memory_space<vmem>>, %arg6: memref<128x16xf32, #tpu.memory_space<vmem>>, %arg7: memref<1x16xf32, #tpu.memory_space<vmem>>, %arg8: memref<8x16xf32, #tpu.memory_space<vmem>>) attributes {dimension_semantics = [#tpu.dimension_semantics<parallel>], iteration_bounds = array<i64: 1>, scalar_prefetch = 0 : i64, scratch_operands = 0 : i64, tpu.core_type = #tpu.core_type<tc>, window_params = [{transform_indices = @transform_0, window_bounds = array<i64: 8, 16>}, {pipeline_mode = #tpu.pipeline_mode<synchronous>, transform_indices = @transform_1, window_bounds = array<i64: 16, 128>}, {pipeline_mode = #tpu.pipeline_mode<synchronous>, transform_indices = @transform_2, window_bounds = array<i64: 1, 128>}, {pipeline_mode = #tpu.pipeline_mode<synchronous>, transform_indices = @transform_3, window_bounds = array<i64: 128, 128>}, {pipeline_mode = #tpu.pipeline_mode<synchronous>, transform_indices = @transform_4, window_bounds = array<i64: 1, 128>}, {pipeline_mode = #tpu.pipeline_mode<synchronous>, transform_indices = @transform_5, window_bounds = array<i64: 128, 16>}, {pipeline_mode = #tpu.pipeline_mode<synchronous>, transform_indices = @transform_6, window_bounds = array<i64: 1, 16>}, {transform_indices = @transform_7, window_bounds = array<i64: 8, 16>}]} {
    %c0 = arith.constant 0 : index
    %c0_0 = arith.constant 0 : index
    %0 = vector.load %arg1[%c0, %c0_0] : memref<8x16xf32, #tpu.memory_space<vmem>>, vector<8x16xf32>
    %c0_1 = arith.constant 0 : index
    %c0_2 = arith.constant 0 : index
    %1 = vector.load %arg2[%c0_1, %c0_2] : memref<16x128xf32, #tpu.memory_space<vmem>>, vector<16x128xf32>
    %cst = arith.constant dense<0.000000e+00> : vector<8x128xf32>
    %2 = tpu.matmul %0, %1, %cst {dimension_numbers = #tpu.dot_dimension_numbers<[1], [0], [0], [1], [0, 0, 1, 1], [], []>} : vector<8x16xf32>, vector<16x128xf32>, vector<8x128xf32> -> vector<8x128xf32>
    %c0_3 = arith.constant 0 : index
    %c0_4 = arith.constant 0 : index
    %3 = vector.load %arg3[%c0_3, %c0_4] : memref<1x128xf32, #tpu.memory_space<vmem>>, vector<1x128xf32>
    %4 = vector.broadcast %3 : vector<1x128xf32> to vector<8x128xf32>
    %5 = arith.addf %2, %4 : vector<8x128xf32>
    %cst_5 = arith.constant 0.000000e+00 : f32
    %6 = vector.broadcast %cst_5 : f32 to vector<8x128xf32>
    %7 = arith.maximumf %5, %6 : vector<8x128xf32>
    %c0_6 = arith.constant 0 : index
    %c0_7 = arith.constant 0 : index
    %8 = vector.load %arg4[%c0_6, %c0_7] : memref<128x128xf32, #tpu.memory_space<vmem>>, vector<128x128xf32>
    %cst_8 = arith.constant dense<0.000000e+00> : vector<8x128xf32>
    %9 = tpu.matmul %7, %8, %cst_8 {dimension_numbers = #tpu.dot_dimension_numbers<[1], [0], [0], [1], [0, 0, 1, 1], [], []>} : vector<8x128xf32>, vector<128x128xf32>, vector<8x128xf32> -> vector<8x128xf32>
    %c0_9 = arith.constant 0 : index
    %c0_10 = arith.constant 0 : index
    %10 = vector.load %arg5[%c0_9, %c0_10] : memref<1x128xf32, #tpu.memory_space<vmem>>, vector<1x128xf32>
    %11 = vector.broadcast %10 : vector<1x128xf32> to vector<8x128xf32>
    %12 = arith.addf %9, %11 : vector<8x128xf32>
    %cst_11 = arith.constant 0.000000e+00 : f32
    %13 = vector.broadcast %cst_11 : f32 to vector<8x128xf32>
    %14 = arith.maximumf %12, %13 : vector<8x128xf32>
    %c0_12 = arith.constant 0 : index
    %c0_13 = arith.constant 0 : index
    %15 = vector.load %arg6[%c0_12, %c0_13] : memref<128x16xf32, #tpu.memory_space<vmem>>, vector<128x16xf32>
    %cst_14 = arith.constant dense<0.000000e+00> : vector<8x16xf32>
    %16 = tpu.matmul %14, %15, %cst_14 {dimension_numbers = #tpu.dot_dimension_numbers<[1], [0], [0], [1], [0, 0, 1, 1], [], []>} : vector<8x128xf32>, vector<128x16xf32>, vector<8x16xf32> -> vector<8x16xf32>
    %c0_15 = arith.constant 0 : index
    %c0_16 = arith.constant 0 : index
    %17 = vector.load %arg7[%c0_15, %c0_16] : memref<1x16xf32, #tpu.memory_space<vmem>>, vector<1x16xf32>
    %18 = vector.broadcast %17 : vector<1x16xf32> to vector<8x16xf32>
    %19 = arith.addf %16, %18 : vector<8x16xf32>
    %c0_17 = arith.constant 0 : index
    %c0_18 = arith.constant 0 : index
    %20 = vector.load %arg8[%c0_17, %c0_18] : memref<8x16xf32, #tpu.memory_space<vmem>>, vector<8x16xf32>
    tpu.vector_store %arg8[%c0_17, %c0_18], %19 {strides = array<i32>} : memref<8x16xf32, #tpu.memory_space<vmem>>, vector<8x16xf32>,
    return
  }
  func.func @transform_0(%arg0: i32) -> (i32, i32) {
    %c0_i32 = arith.constant 0 : i32
    %c0_i32_0 = arith.constant 0 : i32
    return %arg0, %c0_i32 : i32, i32
  }
  func.func @transform_1(%arg0: i32) -> (i32, i32) {
    %c0_i32 = arith.constant 0 : i32
    %c0_i32_0 = arith.constant 0 : i32
    %c0_i32_1 = arith.constant 0 : i32
    return %c0_i32, %c0_i32_0 : i32, i32
  }
  func.func @transform_2(%arg0: i32) -> (i32, i32) {
    %c0_i32 = arith.constant 0 : i32
    %c0_i32_0 = arith.constant 0 : i32
    %c0_i32_1 = arith.constant 0 : i32
    return %c0_i32, %c0_i32_0 : i32, i32
  }
  func.func @transform_3(%arg0: i32) -> (i32, i32) {
    %c0_i32 = arith.constant 0 : i32
    %c0_i32_0 = arith.constant 0 : i32
    %c0_i32_1 = arith.constant 0 : i32
    return %c0_i32, %c0_i32_0 : i32, i32
  }
  func.func @transform_4(%arg0: i32) -> (i32, i32) {
    %c0_i32 = arith.constant 0 : i32
    %c0_i32_0 = arith.constant 0 : i32
    %c0_i32_1 = arith.constant 0 : i32
    return %c0_i32, %c0_i32_0 : i32, i32
  }
  func.func @transform_5(%arg0: i32) -> (i32, i32) {
    %c0_i32 = arith.constant 0 : i32
    %c0_i32_0 = arith.constant 0 : i32
    %c0_i32_1 = arith.constant 0 : i32
    return %c0_i32, %c0_i32_0 : i32, i32
  }
  func.func @transform_6(%arg0: i32) -> (i32, i32) {
    %c0_i32 = arith.constant 0 : i32
    %c0_i32_0 = arith.constant 0 : i32
    %c0_i32_1 = arith.constant 0 : i32
    return %c0_i32, %c0_i32_0 : i32, i32
  }
  func.func @transform_7(%arg0: i32) -> (i32, i32) {
    %c0_i32 = arith.constant 0 : i32
    %c0_i32_0 = arith.constant 0 : i32
    return %arg0, %c0_i32 : i32, i32
  }
}

</mosaic_0001>

<llo_original>
// kernel: tpu_custom_call.1
$region0: #{tpu_custom_call.1}
  #allocation0 [shape = 'u32[]', space=smem, size = 0x4, offset = 0x4, fixed_abs, tag = 'smem constant byte address 0x4 - core index']
  #allocation1 [shape = 'u32[144,128]{1,0:T(1,128)}', space=vmem, size = 0x12000, scoped, tag = 'internal scratch']
  %s0 = inlined_call_operand.hbm [shape: f32[8,16], index: 0, kind: input, shape index: {}]
  %s1 = inlined_call_operand.vmem [shape: f32[16,128], index: 1, kind: input, shape index: {}]
  %s2 = inlined_call_operand.vmem [shape: f32[1,128], index: 2, kind: input, shape index: {}]
  %s3 = inlined_call_operand.vmem [shape: f32[128,128], index: 3, kind: input, shape index: {}]
  %s4 = inlined_call_operand.vmem [shape: f32[1,128], index: 4, kind: input, shape index: {}]
  %s5 = inlined_call_operand.vmem [shape: f32[128,16], index: 5, kind: input, shape index: {}]
  %s6 = inlined_call_operand.vmem [shape: f32[1,16], index: 6, kind: input, shape index: {}]
  %s7 = inlined_call_operand.hbm [shape: f32[8,16], index: 7, kind: output, shape index: {}]
  %s8 = sld [smem:[#allocation0]]
  $region42: #{tpu_custom_call.1} parent=0
    _
  %s10 = ssub.s32 1, %s8
  %s11 = scalar_select 0, %s10, %s8
  $region1: #{tpu_custom_call.1} parent=0
    #allocation2 [shape = 'u8[4096]{0}', space=vmem, size = 0x1000, scoped, tag = 'input window, operand 0, single buffered']
    #allocation3 [shape = 's32[1]{0}', space=sflag, size = 0x4, scoped, tag = 'scoped memory for tpu_custom_call.1']
    #allocation4 [shape = 's32[1]{0}', space=sflag, size = 0x4, scoped, tag = 'scoped memory for tpu_custom_call.1']
    #allocation5 [shape = 'u8[4096]{0}', space=vmem, size = 0x1000, scoped, tag = 'output window, operand 0, single buffered']
    %12 = vsyncpa [#allocation3], 0
    %13 = vsyncpa [#allocation4], 0
    // Predicated region
    $region2: #{tpu_custom_call.1} parent=1 // pred_check
      _
    $region3: #{tpu_custom_call.1} parent=1 // pred_check_branch
      %15 = sbr.rel (0) target = $region5
    $region4: #{tpu_custom_call.1} parent=1 // pred_region
      %s17 = ssub.s32 128, 128
      %18 = vsyncadd [#allocation3], %s17
      %s20 = sshll.u32 [#allocation2], 4
      %s21 = int_to_ptr.vmem [resolvable:$true] %s20
      %23 = dma.hbm_to_vmem [thread:$0]  %s0, 128, %s21, [#allocation3]
    $region5: #{tpu_custom_call.1} parent=1 // pred_fallthru
      _
    // Predicated region
    $region6: #{tpu_custom_call.1} parent=1 // pred_check
      _
    $region7: #{tpu_custom_call.1} parent=1 // pred_check_branch
      %25 = sbr.rel (0) target = $region9
    $region8: #{tpu_custom_call.1} parent=1 // pred_region
      _
    $region9: #{tpu_custom_call.1} parent=1 // pred_fallthru
      _
    // Predicated region
    $region10: #{tpu_custom_call.1} parent=1 // pred_check
      _
    $region11: #{tpu_custom_call.1} parent=1 // pred_check_branch
      %27 = sbr.rel (0) target = $region13
    $region12: #{tpu_custom_call.1} parent=1 // pred_region
      _
    $region13: #{tpu_custom_call.1} parent=1 // pred_fallthru
      _
    // Predicated region
    $region14: #{tpu_custom_call.1} parent=1 // pred_check
      _
    $region15: #{tpu_custom_call.1} parent=1 // pred_check_branch
      %29 = sbr.rel (0) target = $region17
    $region16: #{tpu_custom_call.1} parent=1 // pred_region
      _
    $region17: #{tpu_custom_call.1} parent=1 // pred_fallthru
      _
    // Predicated region
    $region18: #{tpu_custom_call.1} parent=1 // pred_check
      _
    $region19: #{tpu_custom_call.1} parent=1 // pred_check_branch
      %31 = sbr.rel (0) target = $region21
    $region20: #{tpu_custom_call.1} parent=1 // pred_region
      _
    $region21: #{tpu_custom_call.1} parent=1 // pred_fallthru
      _
    // Predicated region
    $region22: #{tpu_custom_call.1} parent=1 // pred_check
      _
    $region23: #{tpu_custom_call.1} parent=1 // pred_check_branch
      %33 = sbr.rel (0) target = $region25
    $region24: #{tpu_custom_call.1} parent=1 // pred_region
      _
    $region25: #{tpu_custom_call.1} parent=1 // pred_fallthru
      _
    // Predicated region
    $region26: #{tpu_custom_call.1} parent=1 // pred_check
      _
    $region27: #{tpu_custom_call.1} parent=1 // pred_check_branch
      %35 = sbr.rel (0) target = $region29
    $region28: #{tpu_custom_call.1} parent=1 // pred_region
      _
    $region29: #{tpu_custom_call.1} parent=1 // pred_fallthru
      _
    // Predicated region
    $region30: #{tpu_custom_call.1} parent=1 // pred_check
      _
    $region31: #{tpu_custom_call.1} parent=1 // pred_check_branch
      %37 = sbr.rel (0) target = $region33
    $region32: #{tpu_custom_call.1} parent=1 // pred_region
      %38 = dma.done [#allocation3], 128
    $region33: #{tpu_custom_call.1} parent=1 // pred_fallthru
      _
    %v39 = vld [vmem:[#allocation2] sm:$0xff]
    %v40 = vld [vmem:[%s1] sm:$0xff]
    %v41 = vld [vmem:[%s1 + $0x8] sm:$0xff]
    %v42 = vld [vmem:[%s2] sm:$0x1]
    %v44 = vlaneseq
    %v45 = vshrl.u32 %v44, 7
    %v46 = vsub.s32 0, %v45
    %v47 = vrot.slane %v42, %v46
    %vm49 = vcmask 130048
    %v51 = vsel %vm49, %v39, 0
    %53 = vmatprep.subr.mxu0 0.0
    %54 = vmatpush1.msra.mxu0 0.0
    %55 = vmatprep.subr.mxu0 0.0
    %56 = vmatpush1.msra.mxu0 0.0
    %57 = vmatprep.subr.mxu0 0.0
    %58 = vmatpush1.msra.mxu0 0.0
    %59 = vmatprep.subr.mxu0 0.0
    %60 = vmatpush1.msra.mxu0 0.0
    %61 = vmatprep.subr.mxu0 0.0
    %62 = vmatpush1.msra.mxu0 0.0
    %63 = vmatprep.subr.mxu0 0.0
    %64 = vmatpush1.msra.mxu0 0.0
    %65 = vmatprep.subr.mxu0 0.0
    %66 = vmatpush1.msra.mxu0 0.0
    %67 = vmatprep.subr.mxu0 0.0
    %68 = vmatpush1.msra.mxu0 0.0
    %69 = vmatprep.subr.mxu0 0.0
    %70 = vmatpush1.msra.mxu0 0.0
    %71 = vmatprep.subr.mxu0 0.0
    %72 = vmatpush1.msra.mxu0 0.0
    %73 = vmatprep.subr.mxu0 0.0
    %74 = vmatpush1.msra.mxu0 0.0
    %75 = vmatprep.subr.mxu0 0.0
    %76 = vmatpush1.msra.mxu0 0.0
    %77 = vmatprep.subr.mxu0 0.0
    %78 = vmatpush1.msra.mxu0 0.0
    %79 = vmatprep.subr.mxu0 0.0
    %80 = vmatpush1.msra.mxu0 0.0
    %81 = vmatprep.subr.mxu0 0.0
    %82 = vmatpush1.msra.mxu0 %v41
    %83 = vmatprep.subr.mxu0 0.0
    %84 = vmatpush1.msra.mxu0 %v40
    %85 = vmatprep.subr.mxu0 0.0
    %86 = vmatpush2.msra.mxu0 0.0
    %87 = vmatprep.subr.mxu0 0.0
    %88 = vmatpush2.msra.mxu0 0.0
    %89 = vmatprep.subr.mxu0 0.0
    %90 = vmatpush2.msra.mxu0 0.0
    %91 = vmatprep.subr.mxu0 0.0
    %92 = vmatpush2.msra.mxu0 0.0
    %93 = vmatprep.subr.mxu0 0.0
    %94 = vmatpush2.msra.mxu0 0.0
    %95 = vmatprep.subr.mxu0 0.0
    %96 = vmatpush2.msra.mxu0 0.0
    %97 = vmatprep.subr.mxu0 0.0
    %98 = vmatpush2.msra.mxu0 0.0
    %99 = vmatprep.subr.mxu0 0.0
    %100 = vmatpush2.msra.mxu0 0.0
    %101 = vmatprep.subr.mxu0 0.0
    %102 = vmatpush2.msra.mxu0 0.0
    %103 = vmatprep.subr.mxu0 0.0
    %104 = vmatpush2.msra.mxu0 0.0
    %105 = vmatprep.subr.mxu0 0.0
    %106 = vmatpush2.msra.mxu0 0.0
    %107 = vmatprep.subr.mxu0 0.0
    %108 = vmatpush2.msra.mxu0 0.0
    %109 = vmatprep.subr.mxu0 0.0
    %110 = vmatpush2.msra.mxu0 0.0
    %111 = vmatprep.subr.mxu0 0.0
    %112 = vmatpush2.msra.mxu0 0.0
    %113 = vmatprep.subr.mxu0 0.0
    %114 = vmatpush2.msra.mxu0 0.0
    %115 = vmatprep.subr.mxu0 0.0
    %116 = vmatpush2.msra.mxu0 0.0
    %117 = vmatprep.mubr.f32.mxu0 0.0
    %118 = vmatmul.mubr.f32.gmra.mxu0 %v51
    %v119 = vpop.f32.mrf.mxu0
    %v120 = vadd.f32 %v47, %v119
    %v121 = vpop.f32.mrf.mxu0
    %122 = vdwg.mxu0
    %v123 = vmax.f32 %v120, 0.0
    %v124 = vld [vmem:[%s3] sm:$0xff]
    %v125 = vld [vmem:[%s3 + $0x8] sm:$0xff]
    %v126 = vld [vmem:[%s3 + $0x10] sm:$0xff]
    %v127 = vld [vmem:[%s3 + $0x18] sm:$0xff]
    %v128 = vld [vmem:[%s3 + $0x20] sm:$0xff]
    %v129 = vld [vmem:[%s3 + $0x28] sm:$0xff]
    %v130 = vld [vmem:[%s3 + $0x30] sm:$0xff]
    %v131 = vld [vmem:[%s3 + $0x38] sm:$0xff]
    %v132 = vld [vmem:[%s3 + $0x40] sm:$0xff]
    %v133 = vld [vmem:[%s3 + $0x48] sm:$0xff]
    %v134 = vld [vmem:[%s3 + $0x50] sm:$0xff]
    %v135 = vld [vmem:[%s3 + $0x58] sm:$0xff]
    %v136 = vld [vmem:[%s3 + $0x60] sm:$0xff]
    %v137 = vld [vmem:[%s3 + $0x68] sm:$0xff]
    %v138 = vld [vmem:[%s3 + $0x70] sm:$0xff]
    %v139 = vld [vmem:[%s3 + $0x78] sm:$0xff]
    %v140 = vld [vmem:[%s4] sm:$0x1]
    %v142 = vlaneseq
    %v143 = vshrl.u32 %v142, 7
    %v144 = vsub.s32 0, %v143
    %v145 = vrot.slane %v140, %v144
    %147 = vmatprep.subr.mxu0 0.0
    %148 = vmatpush1.msra.mxu0 %v139
    %149 = vmatprep.subr.mxu0 0.0
    %150 = vmatpush1.msra.mxu0 %v138
    %151 = vmatprep.subr.mxu0 0.0
    %152 = vmatpush1.msra.mxu0 %v137
    %153 = vmatprep.subr.mxu0 0.0
    %154 = vmatpush1.msra.mxu0 %v136
    %155 = vmatprep.subr.mxu0 0.0
    %156 = vmatpush1.msra.mxu0 %v135
    %157 = vmatprep.subr.mxu0 0.0
    %158 = vmatpush1.msra.mxu0 %v134
    %159 = vmatprep.subr.mxu0 0.0
    %160 = vmatpush1.msra.mxu0 %v133
    %161 = vmatprep.subr.mxu0 0.0
    %162 = vmatpush1.msra.mxu0 %v132
    %163 = vmatprep.subr.mxu0 0.0
    %164 = vmatpush1.msra.mxu0 %v131
    %165 = vmatprep.subr.mxu0 0.0
    %166 = vmatpush1.msra.mxu0 %v130
    %167 = vmatprep.subr.mxu0 0.0
    %168 = vmatpush1.msra.mxu0 %v129
    %169 = vmatprep.subr.mxu0 0.0
    %170 = vmatpush1.msra.mxu0 %v128
    %171 = vmatprep.subr.mxu0 0.0
    %172 = vmatpush1.msra.mxu0 %v127
    %173 = vmatprep.subr.mxu0 0.0
    %174 = vmatpush1.msra.mxu0 %v126
    %175 = vmatprep.subr.mxu0 0.0
    %176 = vmatpush1.msra.mxu0 %v125
    %177 = vmatprep.subr.mxu0 0.0
    %178 = vmatpush1.msra.mxu0 %v124
    %179 = vmatprep.subr.mxu0 0.0
    %180 = vmatpush2.msra.mxu0 0.0
    %181 = vmatprep.subr.mxu0 0.0
    %182 = vmatpush2.msra.mxu0 0.0
    %183 = vmatprep.subr.mxu0 0.0
    %184 = vmatpush2.msra.mxu0 0.0
    %185 = vmatprep.subr.mxu0 0.0
    %186 = vmatpush2.msra.mxu0 0.0
    %187 = vmatprep.subr.mxu0 0.0
    %188 = vmatpush2.msra.mxu0 0.0
    %189 = vmatprep.subr.mxu0 0.0
    %190 = vmatpush2.msra.mxu0 0.0
    %191 = vmatprep.subr.mxu0 0.0
    %192 = vmatpush2.msra.mxu0 0.0
    %193 = vmatprep.subr.mxu0 0.0
    %194 = vmatpush2.msra.mxu0 0.0
    %195 = vmatprep.subr.mxu0 0.0
    %196 = vmatpush2.msra.mxu0 0.0
    %197 = vmatprep.subr.mxu0 0.0
    %198 = vmatpush2.msra.mxu0 0.0
    %199 = vmatprep.subr.mxu0 0.0
    %200 = vmatpush2.msra.mxu0 0.0
    %201 = vmatprep.subr.mxu0 0.0
    %202 = vmatpush2.msra.mxu0 0.0
    %203 = vmatprep.subr.mxu0 0.0
    %204 = vmatpush2.msra.mxu0 0.0
    %205 = vmatprep.subr.mxu0 0.0
    %206 = vmatpush2.msra.mxu0 0.0
    %207 = vmatprep.subr.mxu0 0.0
    %208 = vmatpush2.msra.mxu0 0.0
    %209 = vmatprep.subr.mxu0 0.0
    %210 = vmatpush2.msra.mxu0 0.0
    %211 = vmatprep.mubr.f32.mxu0 0.0
    %212 = vmatmul.mubr.f32.gmra.mxu0 %v123
    %v213 = vpop.f32.mrf.mxu0
    %v214 = vadd.f32 %v145, %v213
    %v215 = vpop.f32.mrf.mxu0
    %216 = vdwg.mxu0
    %v217 = vmax.f32 %v214, 0.0
    %v218 = vld [vmem:[%s5] sm:$0xff]
    %v219 = vld [vmem:[%s5 + $0x8] sm:$0xff]
    %v220 = vld [vmem:[%s5 + $0x10] sm:$0xff]
    %v221 = vld [vmem:[%s5 + $0x18] sm:$0xff]
    %v222 = vld [vmem:[%s5 + $0x20] sm:$0xff]
    %v223 = vld [vmem:[%s5 + $0x28] sm:$0xff]
    %v224 = vld [vmem:[%s5 + $0x30] sm:$0xff]
    %v225 = vld [vmem:[%s5 + $0x38] sm:$0xff]
    %v226 = vld [vmem:[%s5 + $0x40] sm:$0xff]
    %v227 = vld [vmem:[%s5 + $0x48] sm:$0xff]
    %v228 = vld [vmem:[%s5 + $0x50] sm:$0xff]
    %v229 = vld [vmem:[%s5 + $0x58] sm:$0xff]
    %v230 = vld [vmem:[%s5 + $0x60] sm:$0xff]
    %v231 = vld [vmem:[%s5 + $0x68] sm:$0xff]
    %v232 = vld [vmem:[%s5 + $0x70] sm:$0xff]
    %v233 = vld [vmem:[%s5 + $0x78] sm:$0xff]
    %v234 = vld [vmem:[%s6] sm:$0x1]
    %v236 = vlaneseq
    %v237 = vshrl.u32 %v236, 7
    %v238 = vsub.s32 0, %v237
    %v239 = vrot.slane %v234, %v238
    %241 = vmatprep.subr.mxu0 0.0
    %242 = vmatpush1.msra.mxu0 %v233
    %243 = vmatprep.subr.mxu0 0.0
    %244 = vmatpush1.msra.mxu0 %v232
    %245 = vmatprep.subr.mxu0 0.0
    %246 = vmatpush1.msra.mxu0 %v231
    %247 = vmatprep.subr.mxu0 0.0
    %248 = vmatpush1.msra.mxu0 %v230
    %249 = vmatprep.subr.mxu0 0.0
    %250 = vmatpush1.msra.mxu0 %v229
    %251 = vmatprep.subr.mxu0 0.0
    %252 = vmatpush1.msra.mxu0 %v228
    %253 = vmatprep.subr.mxu0 0.0
    %254 = vmatpush1.msra.mxu0 %v227
    %255 = vmatprep.subr.mxu0 0.0
    %256 = vmatpush1.msra.mxu0 %v226
    %257 = vmatprep.subr.mxu0 0.0
    %258 = vmatpush1.msra.mxu0 %v225
    %259 = vmatprep.subr.mxu0 0.0
    %260 = vmatpush1.msra.mxu0 %v224
    %261 = vmatprep.subr.mxu0 0.0
    %262 = vmatpush1.msra.mxu0 %v223
    %263 = vmatprep.subr.mxu0 0.0
    %264 = vmatpush1.msra.mxu0 %v222
    %265 = vmatprep.subr.mxu0 0.0
    %266 = vmatpush1.msra.mxu0 %v221
    %267 = vmatprep.subr.mxu0 0.0
    %268 = vmatpush1.msra.mxu0 %v220
    %269 = vmatprep.subr.mxu0 0.0
    %270 = vmatpush1.msra.mxu0 %v219
    %271 = vmatprep.subr.mxu0 0.0
    %272 = vmatpush1.msra.mxu0 %v218
    %273 = vmatprep.subr.mxu0 0.0
    %274 = vmatpush2.msra.mxu0 0.0
    %275 = vmatprep.subr.mxu0 0.0
    %276 = vmatpush2.msra.mxu0 0.0
    %277 = vmatprep.subr.mxu0 0.0
    %278 = vmatpush2.msra.mxu0 0.0
    %279 = vmatprep.subr.mxu0 0.0
    %280 = vmatpush2.msra.mxu0 0.0
    %281 = vmatprep.subr.mxu0 0.0
    %282 = vmatpush2.msra.mxu0 0.0
    %283 = vmatprep.subr.mxu0 0.0
    %284 = vmatpush2.msra.mxu0 0.0
    %285 = vmatprep.subr.mxu0 0.0
    %286 = vmatpush2.msra.mxu0 0.0
    %287 = vmatprep.subr.mxu0 0.0
    %288 = vmatpush2.msra.mxu0 0.0
    %289 = vmatprep.subr.mxu0 0.0
    %290 = vmatpush2.msra.mxu0 0.0
    %291 = vmatprep.subr.mxu0 0.0
    %292 = vmatpush2.msra.mxu0 0.0
    %293 = vmatprep.subr.mxu0 0.0
    %294 = vmatpush2.msra.mxu0 0.0
    %295 = vmatprep.subr.mxu0 0.0
    %296 = vmatpush2.msra.mxu0 0.0
    %297 = vmatprep.subr.mxu0 0.0
    %298 = vmatpush2.msra.mxu0 0.0
    %299 = vmatprep.subr.mxu0 0.0
    %300 = vmatpush2.msra.mxu0 0.0
    %301 = vmatprep.subr.mxu0 0.0
    %302 = vmatpush2.msra.mxu0 0.0
    %303 = vmatprep.subr.mxu0 0.0
    %304 = vmatpush2.msra.mxu0 0.0
    %305 = vmatprep.mubr.f32.mxu0 0.0
    %306 = vmatmul.mubr.f32.gmra.mxu0 %v217
    %v307 = vpop.f32.mrf.mxu0
    %v308 = vadd.f32 %v239, %v307
    %v309 = vpop.f32.mrf.mxu0
    %310 = vdwg.mxu0
    %311 = vst.msk [vmem:[#allocation5] sm:$0xff] %vm49, %v308
    // Predicated region
    $region34: #{tpu_custom_call.1} parent=1 // pred_check
      _
    $region35: #{tpu_custom_call.1} parent=1 // pred_check_branch
      %313 = sbr.rel (0) target = $region37
    $region36: #{tpu_custom_call.1} parent=1 // pred_region
      %s315 = ssub.s32 128, 128
      %316 = vsyncadd [#allocation4], %s315
      %s318 = sshll.u32 [#allocation5], 4
      %s319 = int_to_ptr.vmem [resolvable:$true] %s318
      %321 = dma.vmem_to_hbm [thread:$0]  %s319, 128, %s7, [#allocation4]
    $region37: #{tpu_custom_call.1} parent=1 // pred_fallthru
      _
    // Predicated region
    $region38: #{tpu_custom_call.1} parent=1 // pred_check
      _
    $region39: #{tpu_custom_call.1} parent=1 // pred_check_branch
      %323 = sbr.rel (0) target = $region41
    $region40: #{tpu_custom_call.1} parent=1 // pred_region
      %324 = dma.done [#allocation4], 128
    $region41: #{tpu_custom_call.1} parent=1 // pred_fallthru
      _
    %325 = vsyncpa [#allocation3], 1
    %326 = vsyncpa [#allocation4], 1

// kernel: tpu_custom_call.1
$region0: #{tpu_custom_call.1}
  #allocation0 [shape = 'u32[]', space=smem, size = 0x4, offset = 0x4, fixed_abs, tag = 'smem constant byte address 0x4 - core index']
  #allocation1 [shape = 'u32[144,128]{1,0:T(1,128)}', space=vmem, size = 0x12000, scoped, tag = 'internal scratch']
  %s0 = inlined_call_operand.hbm [shape: f32[8,16], index: 0, kind: input, shape index: {}]
  %s1 = inlined_call_operand.vmem [shape: f32[16,128], index: 1, kind: input, shape index: {}]
  %s2 = inlined_call_operand.vmem [shape: f32[1,128], index: 2, kind: input, shape index: {}]
  %s3 = inlined_call_operand.vmem [shape: f32[128,128], index: 3, kind: input, shape index: {}]
  %s4 = inlined_call_operand.vmem [shape: f32[1,128], index: 4, kind: input, shape index: {}]
  %s5 = inlined_call_operand.vmem [shape: f32[128,16], index: 5, kind: input, shape index: {}]
  %s6 = inlined_call_operand.vmem [shape: f32[1,16], index: 6, kind: input, shape index: {}]
  %s7 = inlined_call_operand.hbm [shape: f32[8,16], index: 7, kind: output, shape index: {}]
  %s8 = sld [smem:[#allocation0]]
  $region42: #{tpu_custom_call.1} parent=0
    _
  %s10 = ssub.s32 1, %s8
  %s11 = scalar_select 0, %s10, %s8
  $region1: #{tpu_custom_call.1} parent=0
    #allocation2 [shape = 'u8[4096]{0}', space=vmem, size = 0x1000, scoped, tag = 'input window, operand 0, single buffered']
    #allocation3 [shape = 's32[1]{0}', space=sflag, size = 0x4, scoped, tag = 'scoped memory for tpu_custom_call.1']
    #allocation4 [shape = 's32[1]{0}', space=sflag, size = 0x4, scoped, tag = 'scoped memory for tpu_custom_call.1']
    #allocation5 [shape = 'u8[4096]{0}', space=vmem, size = 0x1000, scoped, tag = 'output window, operand 0, single buffered']
    %12 = vsyncpa [#allocation3], 0
    %13 = vsyncpa [#allocation4], 0
    // Predicated region
    $region2: #{tpu_custom_call.1} parent=1 // pred_check
      _
    $region3: #{tpu_custom_call.1} parent=1 // pred_check_branch
      %15 = sbr.rel (0) target = $region5
    $region4: #{tpu_custom_call.1} parent=1 // pred_region
      %s17 = ssub.s32 128, 128
      %18 = vsyncadd [#allocation3], %s17
      %s20 = sshll.u32 [#allocation2], 4
      %s21 = int_to_ptr.vmem [resolvable:$true] %s20
      %23 = dma.hbm_to_vmem [thread:$0]  %s0, 128, %s21, [#allocation3]
    $region5: #{tpu_custom_call.1} parent=1 // pred_fallthru
      _
    // Predicated region
    $region6: #{tpu_custom_call.1} parent=1 // pred_check
      _
    $region7: #{tpu_custom_call.1} parent=1 // pred_check_branch
      %25 = sbr.rel (0) target = $region9
    $region8: #{tpu_custom_call.1} parent=1 // pred_region
      _
    $region9: #{tpu_custom_call.1} parent=1 // pred_fallthru
      _
    // Predicated region
    $region10: #{tpu_custom_call.1} parent=1 // pred_check
      _
    $region11: #{tpu_custom_call.1} parent=1 // pred_check_branch
      %27 = sbr.rel (0) target = $region13
    $region12: #{tpu_custom_call.1} parent=1 // pred_region
      _
    $region13: #{tpu_custom_call.1} parent=1 // pred_fallthru
      _
    // Predicated region
    $region14: #{tpu_custom_call.1} parent=1 // pred_check
      _
    $region15: #{tpu_custom_call.1} parent=1 // pred_check_branch
      %29 = sbr.rel (0) target = $region17
    $region16: #{tpu_custom_call.1} parent=1 // pred_region
      _
    $region17: #{tpu_custom_call.1} parent=1 // pred_fallthru
      _
    // Predicated region
    $region18: #{tpu_custom_call.1} parent=1 // pred_check
      _
    $region19: #{tpu_custom_call.1} parent=1 // pred_check_branch
      %31 = sbr.rel (0) target = $region21
    $region20: #{tpu_custom_call.1} parent=1 // pred_region
      _
    $region21: #{tpu_custom_call.1} parent=1 // pred_fallthru
      _
    // Predicated region
    $region22: #{tpu_custom_call.1} parent=1 // pred_check
      _
    $region23: #{tpu_custom_call.1} parent=1 // pred_check_branch
      %33 = sbr.rel (0) target = $region25
    $region24: #{tpu_custom_call.1} parent=1 // pred_region
      _
    $region25: #{tpu_custom_call.1} parent=1 // pred_fallthru
      _
    // Predicated region
    $region26: #{tpu_custom_call.1} parent=1 // pred_check
      _
    $region27: #{tpu_custom_call.1} parent=1 // pred_check_branch
      %35 = sbr.rel (0) target = $region29
    $region28: #{tpu_custom_call.1} parent=1 // pred_region
      _
    $region29: #{tpu_custom_call.1} parent=1 // pred_fallthru
      _
    // Predicated region
    $region30: #{tpu_custom_call.1} parent=1 // pred_check
      _
    $region31: #{tpu_custom_call.1} parent=1 // pred_check_branch
      %37 = sbr.rel (0) target = $region33
    $region32: #{tpu_custom_call.1} parent=1 // pred_region
      %38 = dma.done [#allocation3], 128
    $region33: #{tpu_custom_call.1} parent=1 // pred_fallthru
      _
    %v39 = vld [vmem:[#allocation2] sm:$0xff]
    %v40 = vld [vmem:[%s1] sm:$0xff]
    %v41 = vld [vmem:[%s1 + $0x8] sm:$0xff]
    %v42 = vld [vmem:[%s2] sm:$0x1]
    %v44 = vlaneseq
    %v45 = vshrl.u32 %v44, 7
    %v46 = vsub.s32 0, %v45
    %v47 = vrot.slane %v42, %v46
    %vm49 = vcmask 130048
    %v51 = vsel %vm49, %v39, 0
    %53 = vmatprep.subr.mxu0 0.0
    %54 = vmatpush1.msra.mxu0 0.0
    %55 = vmatprep.subr.mxu0 0.0
    %56 = vmatpush1.msra.mxu0 0.0
    %57 = vmatprep.subr.mxu0 0.0
    %58 = vmatpush1.msra.mxu0 0.0
    %59 = vmatprep.subr.mxu0 0.0
    %60 = vmatpush1.msra.mxu0 0.0
    %61 = vmatprep.subr.mxu0 0.0
    %62 = vmatpush1.msra.mxu0 0.0
    %63 = vmatprep.subr.mxu0 0.0
    %64 = vmatpush1.msra.mxu0 0.0
    %65 = vmatprep.subr.mxu0 0.0
    %66 = vmatpush1.msra.mxu0 0.0
    %67 = vmatprep.subr.mxu0 0.0
    %68 = vmatpush1.msra.mxu0 0.0
    %69 = vmatprep.subr.mxu0 0.0
    %70 = vmatpush1.msra.mxu0 0.0
    %71 = vmatprep.subr.mxu0 0.0
    %72 = vmatpush1.msra.mxu0 0.0
    %73 = vmatprep.subr.mxu0 0.0
    %74 = vmatpush1.msra.mxu0 0.0
    %75 = vmatprep.subr.mxu0 0.0
    %76 = vmatpush1.msra.mxu0 0.0
    %77 = vmatprep.subr.mxu0 0.0
    %78 = vmatpush1.msra.mxu0 0.0
    %79 = vmatprep.subr.mxu0 0.0
    %80 = vmatpush1.msra.mxu0 0.0
    %81 = vmatprep.subr.mxu0 0.0
    %82 = vmatpush1.msra.mxu0 %v41
    %83 = vmatprep.subr.mxu0 0.0
    %84 = vmatpush1.msra.mxu0 %v40
    %85 = vmatprep.subr.mxu0 0.0
    %86 = vmatpush2.msra.mxu0 0.0
    %87 = vmatprep.subr.mxu0 0.0
    %88 = vmatpush2.msra.mxu0 0.0
    %89 = vmatprep.subr.mxu0 0.0
    %90 = vmatpush2.msra.mxu0 0.0
    %91 = vmatprep.subr.mxu0 0.0
    %92 = vmatpush2.msra.mxu0 0.0
    %93 = vmatprep.subr.mxu0 0.0
    %94 = vmatpush2.msra.mxu0 0.0
    %95 = vmatprep.subr.mxu0 0.0
    %96 = vmatpush2.msra.mxu0 0.0
    %97 = vmatprep.subr.mxu0 0.0
    %98 = vmatpush2.msra.mxu0 0.0
    %99 = vmatprep.subr.mxu0 0.0
    %100 = vmatpush2.msra.mxu0 0.0
    %101 = vmatprep.subr.mxu0 0.0
    %102 = vmatpush2.msra.mxu0 0.0
    %103 = vmatprep.subr.mxu0 0.0
    %104 = vmatpush2.msra.mxu0 0.0
    %105 = vmatprep.subr.mxu0 0.0
    %106 = vmatpush2.msra.mxu0 0.0
    %107 = vmatprep.subr.mxu0 0.0
    %108 = vmatpush2.msra.mxu0 0.0
    %109 = vmatprep.subr.mxu0 0.0
    %110 = vmatpush2.msra.mxu0 0.0
    %111 = vmatprep.subr.mxu0 0.0
    %112 = vmatpush2.msra.mxu0 0.0
    %113 = vmatprep.subr.mxu0 0.0
    %114 = vmatpush2.msra.mxu0 0.0
    %115 = vmatprep.subr.mxu0 0.0
    %116 = vmatpush2.msra.mxu0 0.0
    %117 = vmatprep.mubr.f32.mxu0 0.0
    %118 = vmatmul.mubr.f32.gmra.mxu0 %v51
    %v119 = vpop.f32.mrf.mxu0
    %v120 = vadd.f32 %v47, %v119
    %v121 = vpop.f32.mrf.mxu0
    %122 = vdwg.mxu0
    %v123 = vmax.f32 %v120, 0.0
    %v124 = vld [vmem:[%s3] sm:$0xff]
    %v125 = vld [vmem:[%s3 + $0x8] sm:$0xff]
    %v126 = vld [vmem:[%s3 + $0x10] sm:$0xff]
    %v127 = vld [vmem:[%s3 + $0x18] sm:$0xff]
    %v128 = vld [vmem:[%s3 + $0x20] sm:$0xff]
    %v129 = vld [vmem:[%s3 + $0x28] sm:$0xff]
    %v130 = vld [vmem:[%s3 + $0x30] sm:$0xff]
    %v131 = vld [vmem:[%s3 + $0x38] sm:$0xff]
    %v132 = vld [vmem:[%s3 + $0x40] sm:$0xff]
    %v133 = vld [vmem:[%s3 + $0x48] sm:$0xff]
    %v134 = vld [vmem:[%s3 + $0x50] sm:$0xff]
    %v135 = vld [vmem:[%s3 + $0x58] sm:$0xff]
    %v136 = vld [vmem:[%s3 + $0x60] sm:$0xff]
    %v137 = vld [vmem:[%s3 + $0x68] sm:$0xff]
    %v138 = vld [vmem:[%s3 + $0x70] sm:$0xff]
    %v139 = vld [vmem:[%s3 + $0x78] sm:$0xff]
    %v140 = vld [vmem:[%s4] sm:$0x1]
    %v142 = vlaneseq
    %v143 = vshrl.u32 %v142, 7
    %v144 = vsub.s32 0, %v143
    %v145 = vrot.slane %v140, %v144
    %147 = vmatprep.subr.mxu0 0.0
    %148 = vmatpush1.msra.mxu0 %v139
    %149 = vmatprep.subr.mxu0 0.0
    %150 = vmatpush1.msra.mxu0 %v138
    %151 = vmatprep.subr.mxu0 0.0
    %152 = vmatpush1.msra.mxu0 %v137
    %153 = vmatprep.subr.mxu0 0.0
    %154 = vmatpush1.msra.mxu0 %v136
    %155 = vmatprep.subr.mxu0 0.0
    %156 = vmatpush1.msra.mxu0 %v135
    %157 = vmatprep.subr.mxu0 0.0
    %158 = vmatpush1.msra.mxu0 %v134
    %159 = vmatprep.subr.mxu0 0.0
    %160 = vmatpush1.msra.mxu0 %v133
    %161 = vmatprep.subr.mxu0 0.0
    %162 = vmatpush1.msra.mxu0 %v132
    %163 = vmatprep.subr.mxu0 0.0
    %164 = vmatpush1.msra.mxu0 %v131
    %165 = vmatprep.subr.mxu0 0.0
    %166 = vmatpush1.msra.mxu0 %v130
    %167 = vmatprep.subr.mxu0 0.0
    %168 = vmatpush1.msra.mxu0 %v129
    %169 = vmatprep.subr.mxu0 0.0
    %170 = vmatpush1.msra.mxu0 %v128
    %171 = vmatprep.subr.mxu0 0.0
    %172 = vmatpush1.msra.mxu0 %v127
    %173 = vmatprep.subr.mxu0 0.0
    %174 = vmatpush1.msra.mxu0 %v126
    %175 = vmatprep.subr.mxu0 0.0
    %176 = vmatpush1.msra.mxu0 %v125
    %177 = vmatprep.subr.mxu0 0.0
    %178 = vmatpush1.msra.mxu0 %v124
    %179 = vmatprep.subr.mxu0 0.0
    %180 = vmatpush2.msra.mxu0 0.0
    %181 = vmatprep.subr.mxu0 0.0
    %182 = vmatpush2.msra.mxu0 0.0
    %183 = vmatprep.subr.mxu0 0.0
    %184 = vmatpush2.msra.mxu0 0.0
    %185 = vmatprep.subr.mxu0 0.0
    %186 = vmatpush2.msra.mxu0 0.0
    %187 = vmatprep.subr.mxu0 0.0
    %188 = vmatpush2.msra.mxu0 0.0
    %189 = vmatprep.subr.mxu0 0.0
    %190 = vmatpush2.msra.mxu0 0.0
    %191 = vmatprep.subr.mxu0 0.0
    %192 = vmatpush2.msra.mxu0 0.0
    %193 = vmatprep.subr.mxu0 0.0
    %194 = vmatpush2.msra.mxu0 0.0
    %195 = vmatprep.subr.mxu0 0.0
    %196 = vmatpush2.msra.mxu0 0.0
    %197 = vmatprep.subr.mxu0 0.0
    %198 = vmatpush2.msra.mxu0 0.0
    %199 = vmatprep.subr.mxu0 0.0
    %200 = vmatpush2.msra.mxu0 0.0
    %201 = vmatprep.subr.mxu0 0.0
    %202 = vmatpush2.msra.mxu0 0.0
    %203 = vmatprep.subr.mxu0 0.0
    %204 = vmatpush2.msra.mxu0 0.0
    %205 = vmatprep.subr.mxu0 0.0
    %206 = vmatpush2.msra.mxu0 0.0
    %207 = vmatprep.subr.mxu0 0.0
    %208 = vmatpush2.msra.mxu0 0.0
    %209 = vmatprep.subr.mxu0 0.0
    %210 = vmatpush2.msra.mxu0 0.0
    %211 = vmatprep.mubr.f32.mxu0 0.0
    %212 = vmatmul.mubr.f32.gmra.mxu0 %v123
    %v213 = vpop.f32.mrf.mxu0
    %v214 = vadd.f32 %v145, %v213
    %v215 = vpop.f32.mrf.mxu0
    %216 = vdwg.mxu0
    %v217 = vmax.f32 %v214, 0.0
    %v218 = vld [vmem:[%s5] sm:$0xff]
    %v219 = vld [vmem:[%s5 + $0x8] sm:$0xff]
    %v220 = vld [vmem:[%s5 + $0x10] sm:$0xff]
    %v221 = vld [vmem:[%s5 + $0x18] sm:$0xff]
    %v222 = vld [vmem:[%s5 + $0x20] sm:$0xff]
    %v223 = vld [vmem:[%s5 + $0x28] sm:$0xff]
    %v224 = vld [vmem:[%s5 + $0x30] sm:$0xff]
    %v225 = vld [vmem:[%s5 + $0x38] sm:$0xff]
    %v226 = vld [vmem:[%s5 + $0x40] sm:$0xff]
    %v227 = vld [vmem:[%s5 + $0x48] sm:$0xff]
    %v228 = vld [vmem:[%s5 + $0x50] sm:$0xff]
    %v229 = vld [vmem:[%s5 + $0x58] sm:$0xff]
    %v230 = vld [vmem:[%s5 + $0x60] sm:$0xff]
    %v231 = vld [vmem:[%s5 + $0x68] sm:$0xff]
    %v232 = vld [vmem:[%s5 + $0x70] sm:$0xff]
    %v233 = vld [vmem:[%s5 + $0x78] sm:$0xff]
    %v234 = vld [vmem:[%s6] sm:$0x1]
    %v236 = vlaneseq
    %v237 = vshrl.u32 %v236, 7
    %v238 = vsub.s32 0, %v237
    %v239 = vrot.slane %v234, %v238
    %241 = vmatprep.subr.mxu0 0.0
    %242 = vmatpush1.msra.mxu0 %v233
    %243 = vmatprep.subr.mxu0 0.0
    %244 = vmatpush1.msra.mxu0 %v232
    %245 = vmatprep.subr.mxu0 0.0
    %246 = vmatpush1.msra.mxu0 %v231
    %247 = vmatprep.subr.mxu0 0.0
    %248 = vmatpush1.msra.mxu0 %v230
    %249 = vmatprep.subr.mxu0 0.0
    %250 = vmatpush1.msra.mxu0 %v229
    %251 = vmatprep.subr.mxu0 0.0
    %252 = vmatpush1.msra.mxu0 %v228
    %253 = vmatprep.subr.mxu0 0.0
    %254 = vmatpush1.msra.mxu0 %v227
    %255 = vmatprep.subr.mxu0 0.0
    %256 = vmatpush1.msra.mxu0 %v226
    %257 = vmatprep.subr.mxu0 0.0
    %258 = vmatpush1.msra.mxu0 %v225
    %259 = vmatprep.subr.mxu0 0.0
    %260 = vmatpush1.msra.mxu0 %v224
    %261 = vmatprep.subr.mxu0 0.0
    %262 = vmatpush1.msra.mxu0 %v223
    %263 = vmatprep.subr.mxu0 0.0
    %264 = vmatpush1.msra.mxu0 %v222
    %265 = vmatprep.subr.mxu0 0.0
    %266 = vmatpush1.msra.mxu0 %v221
    %267 = vmatprep.subr.mxu0 0.0
    %268 = vmatpush1.msra.mxu0 %v220
    %269 = vmatprep.subr.mxu0 0.0
    %270 = vmatpush1.msra.mxu0 %v219
    %271 = vmatprep.subr.mxu0 0.0
    %272 = vmatpush1.msra.mxu0 %v218
    %273 = vmatprep.subr.mxu0 0.0
    %274 = vmatpush2.msra.mxu0 0.0
    %275 = vmatprep.subr.mxu0 0.0
    %276 = vmatpush2.msra.mxu0 0.0
    %277 = vmatprep.subr.mxu0 0.0
    %278 = vmatpush2.msra.mxu0 0.0
    %279 = vmatprep.subr.mxu0 0.0
    %280 = vmatpush2.msra.mxu0 0.0
    %281 = vmatprep.subr.mxu0 0.0
    %282 = vmatpush2.msra.mxu0 0.0
    %283 = vmatprep.subr.mxu0 0.0
    %284 = vmatpush2.msra.mxu0 0.0
    %285 = vmatprep.subr.mxu0 0.0
    %286 = vmatpush2.msra.mxu0 0.0
    %287 = vmatprep.subr.mxu0 0.0
    %288 = vmatpush2.msra.mxu0 0.0
    %289 = vmatprep.subr.mxu0 0.0
    %290 = vmatpush2.msra.mxu0 0.0
    %291 = vmatprep.subr.mxu0 0.0
    %292 = vmatpush2.msra.mxu0 0.0
    %293 = vmatprep.subr.mxu0 0.0
    %294 = vmatpush2.msra.mxu0 0.0
    %295 = vmatprep.subr.mxu0 0.0
    %296 = vmatpush2.msra.mxu0 0.0
    %297 = vmatprep.subr.mxu0 0.0
    %298 = vmatpush2.msra.mxu0 0.0
    %299 = vmatprep.subr.mxu0 0.0
    %300 = vmatpush2.msra.mxu0 0.0
    %301 = vmatprep.subr.mxu0 0.0
    %302 = vmatpush2.msra.mxu0 0.0
    %303 = vmatprep.subr.mxu0 0.0
    %304 = vmatpush2.msra.mxu0 0.0
    %305 = vmatprep.mubr.f32.mxu0 0.0
    %306 = vmatmul.mubr.f32.gmra.mxu0 %v217
    %v307 = vpop.f32.mrf.mxu0
    %v308 = vadd.f32 %v239, %v307
    %v309 = vpop.f32.mrf.mxu0
    %310 = vdwg.mxu0
    %311 = vst.msk [vmem:[#allocation5] sm:$0xff] %vm49, %v308
    // Predicated region
    $region34: #{tpu_custom_call.1} parent=1 // pred_check
      _
    $region35: #{tpu_custom_call.1} parent=1 // pred_check_branch
      %313 = sbr.rel (0) target = $region37
    $region36: #{tpu_custom_call.1} parent=1 // pred_region
      %s315 = ssub.s32 128, 128
      %316 = vsyncadd [#allocation4], %s315
      %s318 = sshll.u32 [#allocation5], 4
      %s319 = int_to_ptr.vmem [resolvable:$true] %s318
      %321 = dma.vmem_to_hbm [thread:$0]  %s319, 128, %s7, [#allocation4]
    $region37: #{tpu_custom_call.1} parent=1 // pred_fallthru
      _
    // Predicated region
    $region38: #{tpu_custom_call.1} parent=1 // pred_check
      _
    $region39: #{tpu_custom_call.1} parent=1 // pred_check_branch
      %323 = sbr.rel (0) target = $region41
    $region40: #{tpu_custom_call.1} parent=1 // pred_region
      %324 = dma.done [#allocation4], 128
    $region41: #{tpu_custom_call.1} parent=1 // pred_fallthru
      _
    %325 = vsyncpa [#allocation3], 1
    %326 = vsyncpa [#allocation4], 1

</llo_original>
